<compile_context>
chip_gen: v6e
topology: v6e:2x2x1
jax: 0.10.0
libtpu: 0.0.40
codegen_flags: <defaults>
</compile_context>

<pallas_src>
import math

import jax
import jax.numpy as jnp
from jax.experimental import pallas as pl
from jax.experimental.pallas import tpu as pltpu


# ---------------------------------------------------------------------------
# pe buffer (matches PositionalEncoding.__init__ exactly, minus the batch dim)
# ---------------------------------------------------------------------------
def build_pe_table(max_len, n_units, dtype=jnp.float32):
    if n_units % 2 != 0:
        # same limitation as the original torch code (0::2 / 1::2 assignment)
        raise ValueError("n_units must be even")
    position = jnp.arange(0, max_len, dtype=jnp.float32)[:, None]            # [L, 1]
    div_term = jnp.exp(
        jnp.arange(0, n_units, 2, dtype=jnp.float32)
        * -(math.log(10000.0) / n_units))                                    # [D/2]
    angles = position * div_term                                             # [L, D/2]
    pe = jnp.zeros((max_len, n_units), jnp.float32)
    pe = pe.at[:, 0::2].set(jnp.sin(angles))
    pe = pe.at[:, 1::2].set(jnp.cos(angles))
    return pe.astype(dtype)


# ---------------------------------------------------------------------------
# kernel: out[bt, ts, D] = x[bt, ts, D] + pe[ts, D]  (pe broadcast over batch)
# ---------------------------------------------------------------------------
def _add_pe_kernel(x_ref, pe_ref, o_ref):
    o_ref[...] = x_ref[...] + pe_ref[...][None]


# ---------------------------------------------------------------------------
# tiling heuristics
# ---------------------------------------------------------------------------
_MIN_GRID_STEPS = 8            # keep both v7x TCs + the DMA pipeline busy
_SMALL_PROBLEM_BYTES = 4 << 20  # below this, one block (fixed cost dominates)
_MIN_TILE_BYTES = 512 << 10     # never shrink tiles below ~512 KiB for steps


def _cdiv(a, b):
    return -(-a // b)


def _round_up(x, m):
    return _cdiv(x, m) * m


def _sublane(itemsize):
    # dtype-aware second-minor multiple: f32 -> 8, bf16 -> 16, int8/fp8 -> 32
    return {4: 8, 2: 16, 1: 32}.get(itemsize, 8)


def _scoped_vmem_limit():
    # v5e/v6e: 128 MiB physical VMEM -> allow up to 64 MiB scoped.
    # v7x:      64 MiB/TC            -> keep the working set around ~48 MiB.
    try:
        cap = int(pltpu.get_tpu_info().vmem_capacity_bytes)
    except Exception:
        cap = 64 << 20  # conservative default (v7x-sized)
    return int(min(cap * 3 // 4, 64 << 20))


def _choose_tiling(B, S_pad, D, itemsize, scoped_vmem):
    sub = _sublane(itemsize)
    row_bytes = D * itemsize

    # Per-tile row budget: 3 streams (x, out, pe) x double buffering, with pe
    # counted at full block size and a /7 divisor for compiler headroom.
    budget_rows = max(scoped_vmem // (7 * row_bytes), sub)
    budget_rows = (budget_rows // sub) * sub

    ts = min(S_pad, budget_rows)
    ts = max((ts // sub) * sub, sub)
    bt = max(min(B, budget_rows // ts), 1)

    small = 2 * B * S_pad * row_bytes <= _SMALL_PROBLEM_BYTES
    if not small:
        # Guarantee enough parallel steps; shrink the batch tile first (keeps
        # seq tiles big and pe reuse intact), then split the sequence finer,
        # but never below ~512 KiB tiles.
        while bt > 1 and _cdiv(S_pad, ts) * _cdiv(B, bt) < _MIN_GRID_STEPS:
            bt = max(bt // 2, 1)
        min_ts = max(((_MIN_TILE_BYTES // row_bytes) // sub) * sub, sub)
        while ts > min_ts and _cdiv(S_pad, ts) * _cdiv(B, bt) < _MIN_GRID_STEPS:
            ts = max(((ts // 2) // sub) * sub, min_ts)
    return bt, ts


# ---------------------------------------------------------------------------
# forward(x) = x + pe[:, :S]   (dropout = identity, eval mode)
# ---------------------------------------------------------------------------
def positional_encoding(x, pe_table):
    B, S, D = x.shape
    max_len = pe_table.shape[0]
    if S > max_len:
        raise ValueError(f"sequence length {S} exceeds max_len {max_len}")
    if pe_table.dtype != x.dtype:
        # For best perf build the table in the compute dtype at init; this
        # cast is only a fallback.
        pe_table = pe_table.astype(x.dtype)

    itemsize = jnp.dtype(x.dtype).itemsize
    sub = _sublane(itemsize)

    # Pad S only up to the sublane multiple (<= 31 rows); ragged seq/batch
    # edges relative to the tile are handled by the pl.cdiv grid's masked
    # partial blocks, so awkward S never collapses the tile size.
    S_pad = _round_up(S, sub)
    if S_pad != S:
        x = jnp.pad(x, ((0, 0), (0, S_pad - S), (0, 0)))

    scoped_vmem = _scoped_vmem_limit()
    bt, ts = _choose_tiling(B, S_pad, D, itemsize, scoped_vmem)

    n_s = _cdiv(S_pad, ts)
    n_b = _cdiv(B, bt)
    # seq tile OUTER, batch tile inner: the pe block index is constant across
    # the inner loop, so the pe tile is not re-fetched per batch tile.
    grid = (n_s, n_b)

    # double-buffered x, out and pe tiles + headroom, capped per generation
    work_set = 2 * (2 * bt * ts + ts) * D * itemsize
    vmem_limit = int(min(max(work_set + (4 << 20), 4 << 20), scoped_vmem))

    out = pl.pallas_call(
        _add_pe_kernel,
        out_shape=jax.ShapeDtypeStruct((B, S_pad, D), x.dtype),
        grid=grid,
        in_specs=[
            pl.BlockSpec((bt, ts, D), lambda s, b: (b, s, 0)),   # x  -> [Bt, TS, D]
            pl.BlockSpec((ts, D), lambda s, b: (s, 0)),          # pe -> [TS, D]
        ],
        out_specs=pl.BlockSpec((bt, ts, D), lambda s, b: (b, s, 0)),
        compiler_params=pltpu.CompilerParams(
            dimension_semantics=("parallel", "parallel"),
            vmem_limit_bytes=vmem_limit,
        ),
    )(x, pe_table)

    if S_pad != S:
        out = out[:, :S]
    return out


if __name__ == "__main__":
    # TODO(synk): dropout inside forward is omitted (eval mode / p = 0.0).
    MAX_LEN = 5000
    key = jax.random.PRNGKey(0)
    k1, k2, k3 = jax.random.split(key, 3)

    # 1) aligned small shape, f32 (single-block fast path; D mult of 128 ->
    #    lane-dense stores)
    B, S, D = 2, 256, 128
    pe_f32 = build_pe_table(MAX_LEN, D, jnp.float32)
    x1 = jax.random.normal(k1, (B, S, D), jnp.float32)
    out1 = jax.block_until_ready(positional_encoding(x1, pe_f32))
    ref1 = x1 + pe_f32[None, :S, :]
    assert out1.shape == (B, S, D) and out1.dtype == jnp.float32
    assert jnp.allclose(out1, ref1, atol=1e-6, rtol=1e-6)

    # 2) sequence length not a multiple of the sublane tile (exercises the
    #    sublane-pad path)
    B2, S2 = 3, 100
    x2 = jax.random.normal(k2, (B2, S2, D), jnp.float32)
    out2 = jax.block_until_ready(positional_encoding(x2, pe_f32))
    ref2 = x2 + pe_f32[None, :S2, :]
    assert out2.shape == (B2, S2, D)
    assert jnp.allclose(out2, ref2, atol=1e-6, rtol=1e-6)

    # 3) bf16 activations with a bf16 pe table built at "init" (dtype-aware
    #    sublane multiple, no per-call cast)
    B3, S3 = 2, 96
    pe_bf16 = build_pe_table(MAX_LEN, D, jnp.bfloat16)
    x3 = jax.random.normal(k3, (B3, S3, D), jnp.bfloat16)
    out3 = jax.block_until_ready(positional_encoding(x3, pe_bf16))
    ref3 = x3 + pe_bf16[None, :S3, :]
    assert out3.shape == (B3, S3, D) and out3.dtype == jnp.bfloat16
    assert jnp.allclose(out3.astype(jnp.float32), ref3.astype(jnp.float32),
                        atol=1e-2, rtol=1e-2)

    print("KERNEL_OK")
</pallas_src>

<mosaic_0001>
module attributes {stable_mosaic.version = 11 : i64} {
  func.func @_add_pe_kernel(%arg0: i32, %arg1: i32, %arg2: memref<2x256x128xf32, #tpu.memory_space<vmem>>, %arg3: memref<256x128xf32, #tpu.memory_space<vmem>>, %arg4: memref<2x256x128xf32, #tpu.memory_space<vmem>>) attributes {dimension_semantics = [#tpu.dimension_semantics<parallel>, #tpu.dimension_semantics<parallel>], iteration_bounds = array<i64: 1, 1>, scalar_prefetch = 0 : i64, scratch_operands = 0 : i64, tpu.core_type = #tpu.core_type<tc>, window_params = [{transform_indices = @transform_0, window_bounds = array<i64: 2, 256, 128>}, {transform_indices = @transform_1, window_bounds = array<i64: 256, 128>}, {transform_indices = @transform_2, window_bounds = array<i64: 2, 256, 128>}]} {
    %c0 = arith.constant 0 : index
    %c0_0 = arith.constant 0 : index
    %c0_1 = arith.constant 0 : index
    %0 = vector.load %arg2[%c0, %c0_0, %c0_1] : memref<2x256x128xf32, #tpu.memory_space<vmem>>, vector<2x256x128xf32>
    %c0_2 = arith.constant 0 : index
    %c0_3 = arith.constant 0 : index
    %1 = vector.load %arg3[%c0_2, %c0_3] : memref<256x128xf32, #tpu.memory_space<vmem>>, vector<256x128xf32>
    %2 = vector.shape_cast %1 : vector<256x128xf32> to vector<1x256x128xf32>
    %3 = vector.broadcast %2 : vector<1x256x128xf32> to vector<2x256x128xf32>
    %4 = arith.addf %0, %3 : vector<2x256x128xf32>
    %c0_4 = arith.constant 0 : index
    %c0_5 = arith.constant 0 : index
    %c0_6 = arith.constant 0 : index
    %5 = vector.load %arg4[%c0_4, %c0_5, %c0_6] : memref<2x256x128xf32, #tpu.memory_space<vmem>>, vector<2x256x128xf32>
    tpu.vector_store %arg4[%c0_4, %c0_5, %c0_6], %4 {strides = array<i32>} : memref<2x256x128xf32, #tpu.memory_space<vmem>>, vector<2x256x128xf32>,
    return
  }
  func.func @transform_0(%arg0: i32, %arg1: i32) -> (i32, i32, i32) {
    %c0_i32 = arith.constant 0 : i32
    %c0_i32_0 = arith.constant 0 : i32
    return %arg1, %arg0, %c0_i32 : i32, i32, i32
  }
  func.func @transform_1(%arg0: i32, %arg1: i32) -> (i32, i32) {
    %c0_i32 = arith.constant 0 : i32
    %c0_i32_0 = arith.constant 0 : i32
    return %arg0, %c0_i32 : i32, i32
  }
  func.func @transform_2(%arg0: i32, %arg1: i32) -> (i32, i32, i32) {
    %c0_i32 = arith.constant 0 : i32
    %c0_i32_0 = arith.constant 0 : i32
    return %arg1, %arg0, %c0_i32 : i32, i32, i32
  }
}

</mosaic_0001>

<llo_original>
// kernel: tpu_custom_call.1
$region0: #{tpu_custom_call.1}
  #allocation0 [shape = 'u32[]', space=smem, size = 0x4, offset = 0x4, fixed_abs, tag = 'smem constant byte address 0x4 - core index']
  #allocation1 [shape = 'u32[144,128]{1,0:T(1,128)}', space=vmem, size = 0x12000, scoped, tag = 'internal scratch']
  %s0 = inlined_call_operand.hbm [shape: f32[2,256,128], index: 0, kind: input, shape index: {}]
  %s1 = inlined_call_operand.hbm [shape: f32[5000,128], index: 1, kind: input, shape index: {}]
  %s2 = inlined_call_operand.hbm [shape: f32[2,256,128], index: 2, kind: output, shape index: {}]
  %s3 = sld [smem:[#allocation0]]
  $region26: #{tpu_custom_call.1} parent=0
    _
  %s5 = ssub.s32 1, %s3
  %s6 = scalar_select 0, %s5, %s3
  $region1: #{tpu_custom_call.1} parent=0
    #allocation2 [shape = 'u8[262144]{0}', space=vmem, size = 0x40000, scoped, tag = 'input window, operand 0, single buffered']
    #allocation3 [shape = 's32[1]{0}', space=sflag, size = 0x4, scoped, tag = 'scoped memory for tpu_custom_call.1']
    #allocation4 [shape = 's32[1]{0}', space=sflag, size = 0x4, scoped, tag = 'scoped memory for tpu_custom_call.1']
    #allocation5 [shape = 'u8[131072]{0}', space=vmem, size = 0x20000, scoped, tag = 'input window, operand 1, single buffered']
    #allocation6 [shape = 's32[1]{0}', space=sflag, size = 0x4, scoped, tag = 'scoped memory for tpu_custom_call.1']
    #allocation7 [shape = 'u8[262144]{0}', space=vmem, size = 0x40000, scoped, tag = 'output window, operand 0, single buffered']
    %7 = vsyncpa [#allocation3], 0
    %8 = vsyncpa [#allocation6], 0
    %9 = vsyncpa [#allocation4], 0
    // Predicated region
    $region2: #{tpu_custom_call.1} parent=1 // pred_check
      _
    $region3: #{tpu_custom_call.1} parent=1 // pred_check_branch
      %11 = sbr.rel (0) target = $region5
    $region4: #{tpu_custom_call.1} parent=1 // pred_region
      %s13 = ssub.s32 8192, 8192
      %14 = vsyncadd [#allocation3], %s13
      %s15 = sshll.u32 [#allocation2], 4
      %s16 = int_to_ptr.vmem [resolvable:$true] %s15
      %21 = dma.hbm_to_vmem [thread:$0]  %s0, 8192, %s16, [#allocation3], 128, 128, 8
    $region5: #{tpu_custom_call.1} parent=1 // pred_fallthru
      _
    // Predicated region
    $region6: #{tpu_custom_call.1} parent=1 // pred_check
      _
    $region7: #{tpu_custom_call.1} parent=1 // pred_check_branch
      %23 = sbr.rel (0) target = $region9
    $region8: #{tpu_custom_call.1} parent=1 // pred_region
      %s25 = ssub.s32 4096, 4096
      %26 = vsyncadd [#allocation6], %s25
      %s27 = sshll.u32 [#allocation5], 4
      %s28 = int_to_ptr.vmem [resolvable:$true] %s27
      %33 = dma.hbm_to_vmem [thread:$0]  %s1, 4096, %s28, [#allocation6], 128, 128, 8
    $region9: #{tpu_custom_call.1} parent=1 // pred_fallthru
      _
    // Predicated region
    $region10: #{tpu_custom_call.1} parent=1 // pred_check
      _
    $region11: #{tpu_custom_call.1} parent=1 // pred_check_branch
      %35 = sbr.rel (0) target = $region13
    $region12: #{tpu_custom_call.1} parent=1 // pred_region
      %36 = dma.done [#allocation3], 8192
    $region13: #{tpu_custom_call.1} parent=1 // pred_fallthru
      _
    // Predicated region
    $region14: #{tpu_custom_call.1} parent=1 // pred_check
      _
    $region15: #{tpu_custom_call.1} parent=1 // pred_check_branch
      %38 = sbr.rel (0) target = $region17
    $region16: #{tpu_custom_call.1} parent=1 // pred_region
      %39 = dma.done [#allocation6], 4096
    $region17: #{tpu_custom_call.1} parent=1 // pred_fallthru
      _
    %v40 = vld [vmem:[#allocation2] sm:$0xff]
    %v41 = vld [vmem:[#allocation2 + $0x8] sm:$0xff]
    %v42 = vld [vmem:[#allocation2 + $0x10] sm:$0xff]
    %v43 = vld [vmem:[#allocation2 + $0x18] sm:$0xff]
    %v44 = vld [vmem:[#allocation2 + $0x20] sm:$0xff]
    %v45 = vld [vmem:[#allocation2 + $0x28] sm:$0xff]
    %v46 = vld [vmem:[#allocation2 + $0x30] sm:$0xff]
    %v47 = vld [vmem:[#allocation2 + $0x38] sm:$0xff]
    %v48 = vld [vmem:[#allocation2 + $0x40] sm:$0xff]
    %v49 = vld [vmem:[#allocation2 + $0x48] sm:$0xff]
    %v50 = vld [vmem:[#allocation2 + $0x50] sm:$0xff]
    %v51 = vld [vmem:[#allocation2 + $0x58] sm:$0xff]
    %v52 = vld [vmem:[#allocation2 + $0x60] sm:$0xff]
    %v53 = vld [vmem:[#allocation2 + $0x68] sm:$0xff]
    %v54 = vld [vmem:[#allocation2 + $0x70] sm:$0xff]
    %v55 = vld [vmem:[#allocation2 + $0x78] sm:$0xff]
    %v56 = vld [vmem:[#allocation2 + $0x80] sm:$0xff]
    %v57 = vld [vmem:[#allocation2 + $0x88] sm:$0xff]
    %v58 = vld [vmem:[#allocation2 + $0x90] sm:$0xff]
    %v59 = vld [vmem:[#allocation2 + $0x98] sm:$0xff]
    %v60 = vld [vmem:[#allocation2 + $0xa0] sm:$0xff]
    %v61 = vld [vmem:[#allocation2 + $0xa8] sm:$0xff]
    %v62 = vld [vmem:[#allocation2 + $0xb0] sm:$0xff]
    %v63 = vld [vmem:[#allocation2 + $0xb8] sm:$0xff]
    %v64 = vld [vmem:[#allocation2 + $0xc0] sm:$0xff]
    %v65 = vld [vmem:[#allocation2 + $0xc8] sm:$0xff]
    %v66 = vld [vmem:[#allocation2 + $0xd0] sm:$0xff]
    %v67 = vld [vmem:[#allocation2 + $0xd8] sm:$0xff]
    %v68 = vld [vmem:[#allocation2 + $0xe0] sm:$0xff]
    %v69 = vld [vmem:[#allocation2 + $0xe8] sm:$0xff]
    %v70 = vld [vmem:[#allocation2 + $0xf0] sm:$0xff]
    %v71 = vld [vmem:[#allocation2 + $0xf8] sm:$0xff]
    %v72 = vld [vmem:[#allocation2 + $0x100] sm:$0xff]
    %v73 = vld [vmem:[#allocation2 + $0x108] sm:$0xff]
    %v74 = vld [vmem:[#allocation2 + $0x110] sm:$0xff]
    %v75 = vld [vmem:[#allocation2 + $0x118] sm:$0xff]
    %v76 = vld [vmem:[#allocation2 + $0x120] sm:$0xff]
    %v77 = vld [vmem:[#allocation2 + $0x128] sm:$0xff]
    %v78 = vld [vmem:[#allocation2 + $0x130] sm:$0xff]
    %v79 = vld [vmem:[#allocation2 + $0x138] sm:$0xff]
    %v80 = vld [vmem:[#allocation2 + $0x140] sm:$0xff]
    %v81 = vld [vmem:[#allocation2 + $0x148] sm:$0xff]
    %v82 = vld [vmem:[#allocation2 + $0x150] sm:$0xff]
    %v83 = vld [vmem:[#allocation2 + $0x158] sm:$0xff]
    %v84 = vld [vmem:[#allocation2 + $0x160] sm:$0xff]
    %v85 = vld [vmem:[#allocation2 + $0x168] sm:$0xff]
    %v86 = vld [vmem:[#allocation2 + $0x170] sm:$0xff]
    %v87 = vld [vmem:[#allocation2 + $0x178] sm:$0xff]
    %v88 = vld [vmem:[#allocation2 + $0x180] sm:$0xff]
    %v89 = vld [vmem:[#allocation2 + $0x188] sm:$0xff]
    %v90 = vld [vmem:[#allocation2 + $0x190] sm:$0xff]
    %v91 = vld [vmem:[#allocation2 + $0x198] sm:$0xff]
    %v92 = vld [vmem:[#allocation2 + $0x1a0] sm:$0xff]
    %v93 = vld [vmem:[#allocation2 + $0x1a8] sm:$0xff]
    %v94 = vld [vmem:[#allocation2 + $0x1b0] sm:$0xff]
    %v95 = vld [vmem:[#allocation2 + $0x1b8] sm:$0xff]
    %v96 = vld [vmem:[#allocation2 + $0x1c0] sm:$0xff]
    %v97 = vld [vmem:[#allocation2 + $0x1c8] sm:$0xff]
    %v98 = vld [vmem:[#allocation2 + $0x1d0] sm:$0xff]
    %v99 = vld [vmem:[#allocation2 + $0x1d8] sm:$0xff]
    %v100 = vld [vmem:[#allocation2 + $0x1e0] sm:$0xff]
    %v101 = vld [vmem:[#allocation2 + $0x1e8] sm:$0xff]
    %v102 = vld [vmem:[#allocation2 + $0x1f0] sm:$0xff]
    %v103 = vld [vmem:[#allocation2 + $0x1f8] sm:$0xff]
    %v104 = vld [vmem:[#allocation5] sm:$0xff]
    %v105 = vld [vmem:[#allocation5 + $0x8] sm:$0xff]
    %v106 = vld [vmem:[#allocation5 + $0x10] sm:$0xff]
    %v107 = vld [vmem:[#allocation5 + $0x18] sm:$0xff]
    %v108 = vld [vmem:[#allocation5 + $0x20] sm:$0xff]
    %v109 = vld [vmem:[#allocation5 + $0x28] sm:$0xff]
    %v110 = vld [vmem:[#allocation5 + $0x30] sm:$0xff]
    %v111 = vld [vmem:[#allocation5 + $0x38] sm:$0xff]
    %v112 = vld [vmem:[#allocation5 + $0x40] sm:$0xff]
    %v113 = vld [vmem:[#allocation5 + $0x48] sm:$0xff]
    %v114 = vld [vmem:[#allocation5 + $0x50] sm:$0xff]
    %v115 = vld [vmem:[#allocation5 + $0x58] sm:$0xff]
    %v116 = vld [vmem:[#allocation5 + $0x60] sm:$0xff]
    %v117 = vld [vmem:[#allocation5 + $0x68] sm:$0xff]
    %v118 = vld [vmem:[#allocation5 + $0x70] sm:$0xff]
    %v119 = vld [vmem:[#allocation5 + $0x78] sm:$0xff]
    %v120 = vld [vmem:[#allocation5 + $0x80] sm:$0xff]
    %v121 = vld [vmem:[#allocation5 + $0x88] sm:$0xff]
    %v122 = vld [vmem:[#allocation5 + $0x90] sm:$0xff]
    %v123 = vld [vmem:[#allocation5 + $0x98] sm:$0xff]
    %v124 = vld [vmem:[#allocation5 + $0xa0] sm:$0xff]
    %v125 = vld [vmem:[#allocation5 + $0xa8] sm:$0xff]
    %v126 = vld [vmem:[#allocation5 + $0xb0] sm:$0xff]
    %v127 = vld [vmem:[#allocation5 + $0xb8] sm:$0xff]
    %v128 = vld [vmem:[#allocation5 + $0xc0] sm:$0xff]
    %v129 = vld [vmem:[#allocation5 + $0xc8] sm:$0xff]
    %v130 = vld [vmem:[#allocation5 + $0xd0] sm:$0xff]
    %v131 = vld [vmem:[#allocation5 + $0xd8] sm:$0xff]
    %v132 = vld [vmem:[#allocation5 + $0xe0] sm:$0xff]
    %v133 = vld [vmem:[#allocation5 + $0xe8] sm:$0xff]
    %v134 = vld [vmem:[#allocation5 + $0xf0] sm:$0xff]
    %v135 = vld [vmem:[#allocation5 + $0xf8] sm:$0xff]
    %v136 = vadd.f32 %v40, %v104
    %v137 = vadd.f32 %v41, %v105
    %v138 = vadd.f32 %v42, %v106
    %v139 = vadd.f32 %v43, %v107
    %v140 = vadd.f32 %v44, %v108
    %v141 = vadd.f32 %v45, %v109
    %v142 = vadd.f32 %v46, %v110
    %v143 = vadd.f32 %v47, %v111
    %v144 = vadd.f32 %v48, %v112
    %v145 = vadd.f32 %v49, %v113
    %v146 = vadd.f32 %v50, %v114
    %v147 = vadd.f32 %v51, %v115
    %v148 = vadd.f32 %v52, %v116
    %v149 = vadd.f32 %v53, %v117
    %v150 = vadd.f32 %v54, %v118
    %v151 = vadd.f32 %v55, %v119
    %v152 = vadd.f32 %v56, %v120
    %v153 = vadd.f32 %v57, %v121
    %v154 = vadd.f32 %v58, %v122
    %v155 = vadd.f32 %v59, %v123
    %v156 = vadd.f32 %v60, %v124
    %v157 = vadd.f32 %v61, %v125
    %v158 = vadd.f32 %v62, %v126
    %v159 = vadd.f32 %v63, %v127
    %v160 = vadd.f32 %v64, %v128
    %v161 = vadd.f32 %v65, %v129
    %v162 = vadd.f32 %v66, %v130
    %v163 = vadd.f32 %v67, %v131
    %v164 = vadd.f32 %v68, %v132
    %v165 = vadd.f32 %v69, %v133
    %v166 = vadd.f32 %v70, %v134
    %v167 = vadd.f32 %v71, %v135
    %v168 = vadd.f32 %v72, %v104
    %v169 = vadd.f32 %v73, %v105
    %v170 = vadd.f32 %v74, %v106
    %v171 = vadd.f32 %v75, %v107
    %v172 = vadd.f32 %v76, %v108
    %v173 = vadd.f32 %v77, %v109
    %v174 = vadd.f32 %v78, %v110
    %v175 = vadd.f32 %v79, %v111
    %v176 = vadd.f32 %v80, %v112
    %v177 = vadd.f32 %v81, %v113
    %v178 = vadd.f32 %v82, %v114
    %v179 = vadd.f32 %v83, %v115
    %v180 = vadd.f32 %v84, %v116
    %v181 = vadd.f32 %v85, %v117
    %v182 = vadd.f32 %v86, %v118
    %v183 = vadd.f32 %v87, %v119
    %v184 = vadd.f32 %v88, %v120
    %v185 = vadd.f32 %v89, %v121
    %v186 = vadd.f32 %v90, %v122
    %v187 = vadd.f32 %v91, %v123
    %v188 = vadd.f32 %v92, %v124
    %v189 = vadd.f32 %v93, %v125
    %v190 = vadd.f32 %v94, %v126
    %v191 = vadd.f32 %v95, %v127
    %v192 = vadd.f32 %v96, %v128
    %v193 = vadd.f32 %v97, %v129
    %v194 = vadd.f32 %v98, %v130
    %v195 = vadd.f32 %v99, %v131
    %v196 = vadd.f32 %v100, %v132
    %v197 = vadd.f32 %v101, %v133
    %v198 = vadd.f32 %v102, %v134
    %v199 = vadd.f32 %v103, %v135
    %200 = vst [vmem:[#allocation7] sm:$0xff] %v136
    %201 = vst [vmem:[#allocation7 + $0x8] sm:$0xff] %v137
    %202 = vst [vmem:[#allocation7 + $0x10] sm:$0xff] %v138
    %203 = vst [vmem:[#allocation7 + $0x18] sm:$0xff] %v139
    %204 = vst [vmem:[#allocation7 + $0x20] sm:$0xff] %v140
    %205 = vst [vmem:[#allocation7 + $0x28] sm:$0xff] %v141
    %206 = vst [vmem:[#allocation7 + $0x30] sm:$0xff] %v142
    %207 = vst [vmem:[#allocation7 + $0x38] sm:$0xff] %v143
    %208 = vst [vmem:[#allocation7 + $0x40] sm:$0xff] %v144
    %209 = vst [vmem:[#allocation7 + $0x48] sm:$0xff] %v145
    %210 = vst [vmem:[#allocation7 + $0x50] sm:$0xff] %v146
    %211 = vst [vmem:[#allocation7 + $0x58] sm:$0xff] %v147
    %212 = vst [vmem:[#allocation7 + $0x60] sm:$0xff] %v148
    %213 = vst [vmem:[#allocation7 + $0x68] sm:$0xff] %v149
    %214 = vst [vmem:[#allocation7 + $0x70] sm:$0xff] %v150
    %215 = vst [vmem:[#allocation7 + $0x78] sm:$0xff] %v151
    %216 = vst [vmem:[#allocation7 + $0x80] sm:$0xff] %v152
    %217 = vst [vmem:[#allocation7 + $0x88] sm:$0xff] %v153
    %218 = vst [vmem:[#allocation7 + $0x90] sm:$0xff] %v154
    %219 = vst [vmem:[#allocation7 + $0x98] sm:$0xff] %v155
    %220 = vst [vmem:[#allocation7 + $0xa0] sm:$0xff] %v156
    %221 = vst [vmem:[#allocation7 + $0xa8] sm:$0xff] %v157
    %222 = vst [vmem:[#allocation7 + $0xb0] sm:$0xff] %v158
    %223 = vst [vmem:[#allocation7 + $0xb8] sm:$0xff] %v159
    %224 = vst [vmem:[#allocation7 + $0xc0] sm:$0xff] %v160
    %225 = vst [vmem:[#allocation7 + $0xc8] sm:$0xff] %v161
    %226 = vst [vmem:[#allocation7 + $0xd0] sm:$0xff] %v162
    %227 = vst [vmem:[#allocation7 + $0xd8] sm:$0xff] %v163
    %228 = vst [vmem:[#allocation7 + $0xe0] sm:$0xff] %v164
    %229 = vst [vmem:[#allocation7 + $0xe8] sm:$0xff] %v165
    %230 = vst [vmem:[#allocation7 + $0xf0] sm:$0xff] %v166
    %231 = vst [vmem:[#allocation7 + $0xf8] sm:$0xff] %v167
    %232 = vst [vmem:[#allocation7 + $0x100] sm:$0xff] %v168
    %233 = vst [vmem:[#allocation7 + $0x108] sm:$0xff] %v169
    %234 = vst [vmem:[#allocation7 + $0x110] sm:$0xff] %v170
    %235 = vst [vmem:[#allocation7 + $0x118] sm:$0xff] %v171
    %236 = vst [vmem:[#allocation7 + $0x120] sm:$0xff] %v172
    %237 = vst [vmem:[#allocation7 + $0x128] sm:$0xff] %v173
    %238 = vst [vmem:[#allocation7 + $0x130] sm:$0xff] %v174
    %239 = vst [vmem:[#allocation7 + $0x138] sm:$0xff] %v175
    %240 = vst [vmem:[#allocation7 + $0x140] sm:$0xff] %v176
    %241 = vst [vmem:[#allocation7 + $0x148] sm:$0xff] %v177
    %242 = vst [vmem:[#allocation7 + $0x150] sm:$0xff] %v178
    %243 = vst [vmem:[#allocation7 + $0x158] sm:$0xff] %v179
    %244 = vst [vmem:[#allocation7 + $0x160] sm:$0xff] %v180
    %245 = vst [vmem:[#allocation7 + $0x168] sm:$0xff] %v181
    %246 = vst [vmem:[#allocation7 + $0x170] sm:$0xff] %v182
    %247 = vst [vmem:[#allocation7 + $0x178] sm:$0xff] %v183
    %248 = vst [vmem:[#allocation7 + $0x180] sm:$0xff] %v184
    %249 = vst [vmem:[#allocation7 + $0x188] sm:$0xff] %v185
    %250 = vst [vmem:[#allocation7 + $0x190] sm:$0xff] %v186
    %251 = vst [vmem:[#allocation7 + $0x198] sm:$0xff] %v187
    %252 = vst [vmem:[#allocation7 + $0x1a0] sm:$0xff] %v188
    %253 = vst [vmem:[#allocation7 + $0x1a8] sm:$0xff] %v189
    %254 = vst [vmem:[#allocation7 + $0x1b0] sm:$0xff] %v190
    %255 = vst [vmem:[#allocation7 + $0x1b8] sm:$0xff] %v191
    %256 = vst [vmem:[#allocation7 + $0x1c0] sm:$0xff] %v192
    %257 = vst [vmem:[#allocation7 + $0x1c8] sm:$0xff] %v193
    %258 = vst [vmem:[#allocation7 + $0x1d0] sm:$0xff] %v194
    %259 = vst [vmem:[#allocation7 + $0x1d8] sm:$0xff] %v195
    %260 = vst [vmem:[#allocation7 + $0x1e0] sm:$0xff] %v196
    %261 = vst [vmem:[#allocation7 + $0x1e8] sm:$0xff] %v197
    %262 = vst [vmem:[#allocation7 + $0x1f0] sm:$0xff] %v198
    %263 = vst [vmem:[#allocation7 + $0x1f8] sm:$0xff] %v199
    // Predicated region
    $region18: #{tpu_custom_call.1} parent=1 // pred_check
      _
    $region19: #{tpu_custom_call.1} parent=1 // pred_check_branch
      %265 = sbr.rel (0) target = $region21
    $region20: #{tpu_custom_call.1} parent=1 // pred_region
      %s267 = ssub.s32 8192, 8192
      %268 = vsyncadd [#allocation4], %s267
      %s269 = sshll.u32 [#allocation7], 4
      %s270 = int_to_ptr.vmem [resolvable:$true] %s269
      %275 = dma.vmem_to_hbm [thread:$0]  %s270, 8192, %s2, [#allocation4], 128, 128, 8
    $region21: #{tpu_custom_call.1} parent=1 // pred_fallthru
      _
    // Predicated region
    $region22: #{tpu_custom_call.1} parent=1 // pred_check
      _
    $region23: #{tpu_custom_call.1} parent=1 // pred_check_branch
      %277 = sbr.rel (0) target = $region25
    $region24: #{tpu_custom_call.1} parent=1 // pred_region
      %278 = dma.done [#allocation4], 8192
    $region25: #{tpu_custom_call.1} parent=1 // pred_fallthru
      _
    %279 = vsyncpa [#allocation3], 1
    %280 = vsyncpa [#allocation6], 1
    %281 = vsyncpa [#allocation4], 1

</llo_original>
